<compile_context>
chip_gen: v7x
topology: tpu7x:2x2x1
jax: 0.10.0
libtpu: 0.0.40
codegen_flags: <defaults>
</compile_context>

<pallas_src>
import functools

import jax
import jax.numpy as jnp
from jax.experimental import pallas as pl
from jax.experimental.pallas import tpu as pltpu


def _layernorm_kernel(x_ref, gamma_ref, beta_ref, o_ref, *, eps, n_elems):
    # x_ref / gamma_ref / beta_ref / o_ref: (1, rows, cols) — one full sample,
    # lane-dense. Per-sample reduction over the whole tile.
    x = x_ref[...].astype(jnp.float32)

    # One-pass statistics (f32 accumulation).
    s = jnp.sum(x)
    sq = jnp.sum(x * x)
    n = jnp.float32(n_elems)
    mean = s / n
    # Unbiased variance (ddof=1), matching torch.Tensor.std(); clamp guards
    # against catastrophic cancellation in the one-pass formula.
    var = jnp.maximum((sq - s * mean) / jnp.float32(n_elems - 1), 0.0)
    # Single scalar reciprocal per sample (replaces a per-element divide).
    inv = 1.0 / (jnp.sqrt(var) + jnp.float32(eps))

    # Fused normalize + affine: (x - mean) * (gamma * inv) + beta
    scale = gamma_ref[...] * inv
    o_ref[...] = ((x - mean) * scale + beta_ref[...]).astype(o_ref.dtype)


def layer_norm(x, gamma, beta, eps=1e-8):
    """x: (N, C, H, W) float32; gamma, beta: (C,). Matches the PyTorch module."""
    N, C, H, W = x.shape
    HW = H * W
    CHW = C * HW
    assert CHW > 1, "per-sample unbiased std (ddof=1) needs at least 2 elements"

    # Lane/sublane-dense per-sample slab: (CHW/128, 128) when possible,
    # otherwise fall back to (C, HW).
    if CHW % 128 == 0:
        rows, cols = CHW // 128, 128
    else:
        rows, cols = C, HW  # fallback layout; may force masked stores
    x2 = x.reshape(N, rows, cols)

    # Pre-broadcast gamma/beta (per-channel) to the slab layout; shared across
    # all samples via a constant index_map (DMA'd once for the whole launch).
    gfull = jnp.broadcast_to(
        gamma.astype(jnp.float32)[:, None], (C, HW)).reshape(1, rows, cols)
    bfull = jnp.broadcast_to(
        beta.astype(jnp.float32)[:, None], (C, HW)).reshape(1, rows, cols)

    kernel = functools.partial(_layernorm_kernel, eps=eps, n_elems=CHW)

    # VMEM budget: input + output slabs are double-buffered, gamma/beta are
    # effectively single-buffered -> ~6-8 slabs of f32 plus headroom. Clamp to
    # 48 MiB so it stays safe on v7x's 64 MiB physical VMEM.
    slab_bytes = rows * cols * 4
    vmem_limit = int(min(max(8 * slab_bytes + (1 << 20), 16 << 20), 48 << 20))
    # TODO(synk): for very large samples (slab >> a few MiB) switch to an
    # HW-chunked two-pass sum/sumsq reduction instead of one whole-sample block.

    out = pl.pallas_call(
        kernel,
        out_shape=jax.ShapeDtypeStruct((N, rows, cols), x.dtype),
        grid_spec=pltpu.PrefetchScalarGridSpec(
            num_scalar_prefetch=0,
            grid=(N,),
            in_specs=[
                pl.BlockSpec((1, rows, cols), lambda i: (i, 0, 0)),
                pl.BlockSpec((1, rows, cols), lambda i: (0, 0, 0)),
                pl.BlockSpec((1, rows, cols), lambda i: (0, 0, 0)),
            ],
            out_specs=pl.BlockSpec((1, rows, cols), lambda i: (i, 0, 0)),
        ),
        compiler_params=pltpu.CompilerParams(
            dimension_semantics=("parallel",),
            vmem_limit_bytes=vmem_limit,
        ),
    )(x2, gfull, bfull)
    return out.reshape(N, C, H, W)


def layer_norm_ref(x, gamma, beta, eps=1e-8):
    """Pure-JAX reference matching the PyTorch module semantics."""
    N = x.shape[0]
    xf = x.reshape(N, -1)
    mean = xf.mean(axis=1).reshape(N, 1, 1, 1)
    # unbiased std (ddof=1), like torch.std default
    std = jnp.sqrt(
        jnp.sum((xf - xf.mean(axis=1, keepdims=True)) ** 2, axis=1)
        / (xf.shape[1] - 1)
    ).reshape(N, 1, 1, 1)
    y = (x - mean) / (std + eps)
    return y * gamma.reshape(1, -1, 1, 1) + beta.reshape(1, -1, 1, 1)


if __name__ == "__main__":
    key = jax.random.PRNGKey(0)
    kx, kg = jax.random.split(key)

    N, C, H, W = 2, 4, 16, 16
    x = jax.random.normal(kx, (N, C, H, W), dtype=jnp.float32)

    # Deterministic parameter init mirroring the PyTorch __init__:
    #   gamma ~ U[0, 1), beta = zeros
    gamma = jax.random.uniform(kg, (C,), dtype=jnp.float32)
    beta = jnp.zeros((C,), dtype=jnp.float32)

    out = layer_norm(x, gamma, beta, eps=1e-8)
    out = jax.block_until_ready(out)

    ref = layer_norm_ref(x, gamma, beta, eps=1e-8)
    assert jnp.allclose(out, ref, atol=1e-5, rtol=1e-5), "mismatch vs reference"

    print("KERNEL_OK")
</pallas_src>

<mosaic_0001>
module attributes {stable_mosaic.version = 11 : i64} {
  func.func @_layernorm_kernel(%arg0: i32, %arg1: memref<1x8x128xf32, #tpu.memory_space<vmem>>, %arg2: memref<1x8x128xf32, #tpu.memory_space<vmem>>, %arg3: memref<1x8x128xf32, #tpu.memory_space<vmem>>, %arg4: memref<1x8x128xf32, #tpu.memory_space<vmem>>) attributes {dimension_semantics = [#tpu.dimension_semantics<parallel>], iteration_bounds = array<i64: 2>, scalar_prefetch = 0 : i64, scratch_operands = 0 : i64, tpu.core_type = #tpu.core_type<tc>, window_params = [{transform_indices = @transform_0, window_bounds = array<i64: 1, 8, 128>}, {pipeline_mode = #tpu.pipeline_mode<synchronous>, transform_indices = @transform_1, window_bounds = array<i64: 1, 8, 128>}, {pipeline_mode = #tpu.pipeline_mode<synchronous>, transform_indices = @transform_2, window_bounds = array<i64: 1, 8, 128>}, {transform_indices = @transform_3, window_bounds = array<i64: 1, 8, 128>}]} {
    %c0 = arith.constant 0 : index
    %c0_0 = arith.constant 0 : index
    %c0_1 = arith.constant 0 : index
    %0 = vector.load %arg1[%c0, %c0_0, %c0_1] : memref<1x8x128xf32, #tpu.memory_space<vmem>>, vector<1x8x128xf32>
    %1 = vector.shape_cast %0 : vector<1x8x128xf32> to vector<1x1x8x128xf32>
    %cst = arith.constant dense<0.000000e+00> : vector<1xf32>
    %2 = vector.multi_reduction <add>, %1, %cst [1, 2, 3] : vector<1x1x8x128xf32> to vector<1xf32>
    %3 = vector.shape_cast %2 : vector<1xf32> to vector<1x1x1x1xf32>
    %4 = vector.extract %3[0, 0, 0, 0] : f32 from vector<1x1x1x1xf32>
    %5 = arith.mulf %0, %0 : vector<1x8x128xf32>
    %6 = vector.shape_cast %5 : vector<1x8x128xf32> to vector<1x1x8x128xf32>
    %cst_2 = arith.constant dense<0.000000e+00> : vector<1xf32>
    %7 = vector.multi_reduction <add>, %6, %cst_2 [1, 2, 3] : vector<1x1x8x128xf32> to vector<1xf32>
    %8 = vector.shape_cast %7 : vector<1xf32> to vector<1x1x1x1xf32>
    %9 = vector.extract %8[0, 0, 0, 0] : f32 from vector<1x1x1x1xf32>
    %cst_3 = arith.constant 1.024000e+03 : f32
    %10 = arith.divf %4, %cst_3 : f32
    %11 = arith.mulf %4, %10 : f32
    %12 = arith.subf %9, %11 : f32
    %cst_4 = arith.constant 1.023000e+03 : f32
    %13 = arith.divf %12, %cst_4 : f32
    %cst_5 = arith.constant 0.000000e+00 : f32
    %14 = arith.maximumf %13, %cst_5 : f32
    %15 = math.sqrt %14 : f32
    %cst_6 = arith.constant 9.99999993E-9 : f32
    %16 = arith.addf %15, %cst_6 : f32
    %cst_7 = arith.constant 1.000000e+00 : f32
    %17 = arith.divf %cst_7, %16 : f32
    %c0_8 = arith.constant 0 : index
    %c0_9 = arith.constant 0 : index
    %c0_10 = arith.constant 0 : index
    %18 = vector.load %arg2[%c0_8, %c0_9, %c0_10] : memref<1x8x128xf32, #tpu.memory_space<vmem>>, vector<1x8x128xf32>
    %19 = vector.broadcast %17 : f32 to vector<1x8x128xf32>
    %20 = arith.mulf %18, %19 : vector<1x8x128xf32>
    %21 = vector.broadcast %10 : f32 to vector<1x8x128xf32>
    %22 = arith.subf %0, %21 : vector<1x8x128xf32>
    %23 = arith.mulf %22, %20 : vector<1x8x128xf32>
    %c0_11 = arith.constant 0 : index
    %c0_12 = arith.constant 0 : index
    %c0_13 = arith.constant 0 : index
    %24 = vector.load %arg3[%c0_11, %c0_12, %c0_13] : memref<1x8x128xf32, #tpu.memory_space<vmem>>, vector<1x8x128xf32>
    %25 = arith.addf %23, %24 : vector<1x8x128xf32>
    %c0_14 = arith.constant 0 : index
    %c0_15 = arith.constant 0 : index
    %c0_16 = arith.constant 0 : index
    %26 = vector.load %arg4[%c0_14, %c0_15, %c0_16] : memref<1x8x128xf32, #tpu.memory_space<vmem>>, vector<1x8x128xf32>
    tpu.vector_store %arg4[%c0_14, %c0_15, %c0_16], %25 {strides = array<i32>} : memref<1x8x128xf32, #tpu.memory_space<vmem>>, vector<1x8x128xf32>,
    return
  }
  func.func @transform_0(%arg0: i32) -> (i32, i32, i32) {
    %c0_i32 = arith.constant 0 : i32
    %c0_i32_0 = arith.constant 0 : i32
    %c0_i32_1 = arith.constant 0 : i32
    return %arg0, %c0_i32, %c0_i32_0 : i32, i32, i32
  }
  func.func @transform_1(%arg0: i32) -> (i32, i32, i32) {
    %c0_i32 = arith.constant 0 : i32
    %c0_i32_0 = arith.constant 0 : i32
    %c0_i32_1 = arith.constant 0 : i32
    %c0_i32_2 = arith.constant 0 : i32
    return %c0_i32, %c0_i32_0, %c0_i32_1 : i32, i32, i32
  }
  func.func @transform_2(%arg0: i32) -> (i32, i32, i32) {
    %c0_i32 = arith.constant 0 : i32
    %c0_i32_0 = arith.constant 0 : i32
    %c0_i32_1 = arith.constant 0 : i32
    %c0_i32_2 = arith.constant 0 : i32
    return %c0_i32, %c0_i32_0, %c0_i32_1 : i32, i32, i32
  }
  func.func @transform_3(%arg0: i32) -> (i32, i32, i32) {
    %c0_i32 = arith.constant 0 : i32
    %c0_i32_0 = arith.constant 0 : i32
    %c0_i32_1 = arith.constant 0 : i32
    return %arg0, %c0_i32, %c0_i32_0 : i32, i32, i32
  }
}

</mosaic_0001>

<llo_original>
// kernel: tpu_custom_call.1
$region0: #{tpu_custom_call.1}
  #allocation0 [shape = 'u32[]', space=smem, size = 0x4, offset = 0x4, fixed_abs, tag = 'smem constant byte address 0x4 - core index']
  #allocation1 [shape = 'u32[144,128]{1,0:T(1,128)}', space=vmem, size = 0x12000, scoped, tag = 'internal scratch']
  %s0 = inlined_call_operand.hbm [shape: f32[2,8,128], index: 0, kind: input, shape index: {}]
  %s1 = inlined_call_operand.hbm [shape: f32[1,8,128], index: 1, kind: input, shape index: {}]
  %s2 = inlined_call_operand.hbm [shape: f32[1,8,128], index: 2, kind: input, shape index: {}]
  %s3 = inlined_call_operand.hbm [shape: f32[2,8,128], index: 3, kind: output, shape index: {}]
  %s4 = sld [smem:[#allocation0]]
  $region57: #{tpu_custom_call.1} parent=0
    _
  %s6 = ssub.s32 1, %s4
  %s7 = scalar_select 0, %s6, %s4
  $region1: #{tpu_custom_call.1} parent=0
    #allocation2 [shape = 'u8[8192]{0}', space=vmem, size = 0x2000, scoped, tag = 'input window, operand 0']
    #allocation3 [shape = 's32[2]{0}', space=sflag, size = 0x8, scoped, tag = 'scoped memory for tpu_custom_call.1']
    #allocation4 [shape = 's32[2]{0}', space=sflag, size = 0x8, scoped, tag = 'scoped memory for tpu_custom_call.1']
    #allocation5 [shape = 'u8[4096]{0}', space=vmem, size = 0x1000, scoped, tag = 'input window, operand 1, single buffered']
    #allocation6 [shape = 's32[1]{0}', space=sflag, size = 0x4, scoped, tag = 'scoped memory for tpu_custom_call.1']
    #allocation7 [shape = 'u8[4096]{0}', space=vmem, size = 0x1000, scoped, tag = 'input window, operand 2, single buffered']
    #allocation8 [shape = 'u8[8192]{0}', space=vmem, size = 0x2000, scoped, tag = 'output window, operand 0']
    %8 = vsyncpa [#allocation3], 0
    %s9 = scalar_lea.sflag [#allocation3], 1
    %10 = vsyncpa %s9, 0
    %11 = vsyncpa [#allocation6], 0
    %12 = vsyncpa [#allocation4], 0
    %s13 = scalar_lea.sflag [#allocation4], 1
    %14 = vsyncpa %s13, 0
    loop: start=0, step=1, limit=4
    $region2: #{tpu_custom_call.1} parent=1 // loop_pre_header
      _
    $region3: #{tpu_custom_call.1} parent=1 // loop_header
      %s16 = sphi 0, %s20
      %p17 = scmp.ge.s32.totalorder %s16, 4
      %s26 = sphi 0, %s28
      %s29 = sphi 0, %s26
      %s30 = sphi 0, %s29
      %s46 = sphi 0, %s30
      %s50 = sphi 0, %s50
      %s52 = sphi 0, %s50
      %s53 = sphi 0, %s52
      %s67 = sphi 0, %s53
      %s71 = sphi 0, %s71
      %s73 = sphi 0, %s71
      %s74 = sphi 0, %s73
      %s88 = sphi 0, %s74
      %s94 = sphi 0, %s96
      %s97 = sphi 0, %s94
      %s98 = sphi 0, %s97
      %s114 = sphi 0, %s98
    $region4: #{tpu_custom_call.1} parent=1 // loop_header_branch
      %19 = sbr.rel (%p17) target = $region8
    $region5: #{tpu_custom_call.1} parent=1 // loop_body
      %s21 = ssub.s32 %s16, 1
      %s22 = ssub.s32 %s16, 2
      %s23 = sadd.s32 %s16, 1
      %s24 = ssub.s32 %s16, %s23
      %p25 = scmp.eq.s32.totalorder %s24, 0
      %s27 = sadd.s32 %s26, 1
      %s28 = scalar_select %p25, %s26, %s27
      %p31 = pneg %p25
      %p32 = scmp.eq.s32.totalorder %s16, 1
      %p33 = por %p31, %p32
      %p34 = scmp.ne.s32.totalorder %s26, %s29
      %p35 = scmp.eq.s32.totalorder %s16, 0
      %p36 = por %p34, %p35
      %p37 = scmp.ne.s32.totalorder %s26, %s29
      %p38 = scmp.eq.s32.totalorder %s21, 1
      %p39 = por %p37, %p38
      %p40 = scmp.ne.s32.totalorder %s29, %s30
      %p41 = scmp.eq.s32.totalorder %s21, 0
      %p42 = por %p40, %p41
      %p43 = scmp.ne.s32.totalorder %s29, %s30
      %p44 = scmp.eq.s32.totalorder %s22, 1
      %p45 = por %p43, %p44
      %p47 = scmp.ne.s32.totalorder %s30, %s46
      %p48 = scmp.eq.s32.totalorder %s22, 0
      %p49 = por %p47, %p48
      %s51 = sadd.s32 %s50, 1
      %p54 = scmp.eq.s32.totalorder %s16, 1
      %p55 = scmp.ne.s32.totalorder %s50, %s52
      %p56 = scmp.eq.s32.totalorder %s16, 0
      %p57 = por %p55, %p56
      %p58 = scmp.ne.s32.totalorder %s50, %s52
      %p59 = scmp.eq.s32.totalorder %s21, 1
      %p60 = por %p58, %p59
      %p61 = scmp.ne.s32.totalorder %s52, %s53
      %p62 = scmp.eq.s32.totalorder %s21, 0
      %p63 = por %p61, %p62
      %p64 = scmp.ne.s32.totalorder %s52, %s53
      %p65 = scmp.eq.s32.totalorder %s22, 1
      %p66 = por %p64, %p65
      %p68 = scmp.ne.s32.totalorder %s53, %s67
      %p69 = scmp.eq.s32.totalorder %s22, 0
      %p70 = por %p68, %p69
      %s72 = sadd.s32 %s71, 1
      %p75 = scmp.eq.s32.totalorder %s16, 1
      %p76 = scmp.ne.s32.totalorder %s71, %s73
      %p77 = scmp.eq.s32.totalorder %s16, 0
      %p78 = por %p76, %p77
      %p79 = scmp.ne.s32.totalorder %s71, %s73
      %p80 = scmp.eq.s32.totalorder %s21, 1
      %p81 = por %p79, %p80
      %p82 = scmp.ne.s32.totalorder %s73, %s74
      %p83 = scmp.eq.s32.totalorder %s21, 0
      %p84 = por %p82, %p83
      %p85 = scmp.ne.s32.totalorder %s73, %s74
      %p86 = scmp.eq.s32.totalorder %s22, 1
      %p87 = por %p85, %p86
      %p89 = scmp.ne.s32.totalorder %s74, %s88
      %p90 = scmp.eq.s32.totalorder %s22, 0
      %p91 = por %p89, %p90
      %s92 = ssub.s32 %s16, %s23
      %p93 = scmp.eq.s32.totalorder %s92, 0
      %s95 = sadd.s32 %s94, 1
      %s96 = scalar_select %p93, %s94, %s95
      %p99 = pneg %p93
      %p100 = scmp.eq.s32.totalorder %s16, 1
      %p101 = por %p99, %p100
      %p102 = scmp.ne.s32.totalorder %s94, %s97
      %p103 = scmp.eq.s32.totalorder %s16, 0
      %p104 = por %p102, %p103
      %p105 = scmp.ne.s32.totalorder %s94, %s97
      %p106 = scmp.eq.s32.totalorder %s21, 1
      %p107 = por %p105, %p106
      %p108 = scmp.ne.s32.totalorder %s97, %s98
      %p109 = scmp.eq.s32.totalorder %s21, 0
      %p110 = por %p108, %p109
      %p111 = scmp.ne.s32.totalorder %s97, %s98
      %p112 = scmp.eq.s32.totalorder %s22, 1
      %p113 = por %p111, %p112
      %p115 = scmp.ne.s32.totalorder %s98, %s114
      %p116 = scmp.eq.s32.totalorder %s22, 0
      %p117 = por %p115, %p116
      %p118 = scmp.le.s32.totalorder 1, %s16
      %p119 = scmp.lt.s32.totalorder %s16, 3
      %p120 = pnand %p118, %p119
      %p121 = pneg %p120
      // Predicated region
      $region9: #{tpu_custom_call.1} parent=5 // pred_check
        _
      $region10: #{tpu_custom_call.1} parent=5 // pred_check_branch
        %123 = sbr.rel (%p120) target = $region12
      $region11: #{tpu_custom_call.1} parent=5 // pred_region
        %s124 = ssub.s32 %s16, 1
        // Predicated region
        $region13: #{tpu_custom_call.1} parent=11 // pred_check
          %p125 = pneg %p63
        $region14: #{tpu_custom_call.1} parent=11 // pred_check_branch
          %127 = sbr.rel (%p125) target = $region16
        $region15: #{tpu_custom_call.1} parent=11 // pred_region
          %s129 = ssub.s32 128, 128
          %130 = vsyncadd [#allocation6], %s129
          %s132 = sshll.u32 [#allocation5], 4
          %s133 = int_to_ptr.vmem [resolvable:$true] %s132
          %135 = dma.hbm_to_vmem [thread:$0]  %s1, 128, %s133, [#allocation6]
        $region16: #{tpu_custom_call.1} parent=11 // pred_fallthru
          _
        // Predicated region
        $region17: #{tpu_custom_call.1} parent=11 // pred_check
          %p136 = pneg %p84
        $region18: #{tpu_custom_call.1} parent=11 // pred_check_branch
          %138 = sbr.rel (%p136) target = $region20
        $region19: #{tpu_custom_call.1} parent=11 // pred_region
          %s140 = ssub.s32 128, 128
          %141 = vsyncadd [#allocation6], %s140
          %s143 = sshll.u32 [#allocation7], 4
          %s144 = int_to_ptr.vmem [resolvable:$true] %s143
          %146 = dma.hbm_to_vmem [thread:$0]  %s2, 128, %s144, [#allocation6]
        $region20: #{tpu_custom_call.1} parent=11 // pred_fallthru
          _
      $region12: #{tpu_custom_call.1} parent=5 // pred_fallthru
        _
      %p147 = scmp.lt.s32.totalorder %s16, 2
      // Predicated region
      $region21: #{tpu_custom_call.1} parent=5 // pred_check
        %p148 = pneg %p147
      $region22: #{tpu_custom_call.1} parent=5 // pred_check_branch
        %150 = sbr.rel (%p148) target = $region24
      $region23: #{tpu_custom_call.1} parent=5 // pred_region
        // Predicated region
        $region25: #{tpu_custom_call.1} parent=23 // pred_check
          %p151 = pneg %p36
        $region26: #{tpu_custom_call.1} parent=23 // pred_check_branch
          %153 = sbr.rel (%p151) target = $region28
        $region27: #{tpu_custom_call.1} parent=23 // pred_region
          %s154 = sand.u32 %s26, 1
          %s155 = scalar_lea.sflag [#allocation3], %s154
          %s156 = sand.u32 %s26, 1
          %s157 = smul.addr %s156, 8
          %s158 = scalar_lea.vmem [#allocation2], %s157
          %s160 = ssub.s32 128, 128
          %161 = vsyncadd %s155, %s160
          %s162 = smul.addr %s16, 128
          %s163 = scalar_lea.hbm %s0, %s162
          %s165 = sshll.u32 %s158, 4
          %s166 = int_to_ptr.vmem [resolvable:$true] %s165
          %168 = dma.hbm_to_vmem [thread:$0]  %s163, 128, %s166, %s155
        $region28: #{tpu_custom_call.1} parent=23 // pred_fallthru
          _
      $region24: #{tpu_custom_call.1} parent=5 // pred_fallthru
        _
      %p169 = scmp.le.s32.totalorder 1, %s16
      %p170 = scmp.lt.s32.totalorder %s16, 3
      %p171 = pnand %p169, %p170
      %p172 = pneg %p171
      // Predicated region
      $region29: #{tpu_custom_call.1} parent=5 // pred_check
        _
      $region30: #{tpu_custom_call.1} parent=5 // pred_check_branch
        %174 = sbr.rel (%p171) target = $region32
      $region31: #{tpu_custom_call.1} parent=5 // pred_region
        %s175 = ssub.s32 %s16, 1
        %s176 = sand.u32 %s29, 1
        %s177 = scalar_lea.sflag [#allocation3], %s176
        %s178 = sand.u32 %s29, 1
        %s179 = smul.addr %s178, 8
        %s180 = scalar_lea.vmem [#allocation2], %s179
        // Predicated region
        $region33: #{tpu_custom_call.1} parent=31 // pred_check
          %p181 = pneg %p42
        $region34: #{tpu_custom_call.1} parent=31 // pred_check_branch
          %183 = sbr.rel (%p181) target = $region36
        $region35: #{tpu_custom_call.1} parent=31 // pred_region
          %184 = dma.done %s177, 128
        $region36: #{tpu_custom_call.1} parent=31 // pred_fallthru
          _
        // Predicated region
        $region37: #{tpu_custom_call.1} parent=31 // pred_check
          %p185 = pneg %p63
        $region38: #{tpu_custom_call.1} parent=31 // pred_check_branch
          %187 = sbr.rel (%p185) target = $region40
        $region39: #{tpu_custom_call.1} parent=31 // pred_region
          %188 = dma.done [#allocation6], 128
        $region40: #{tpu_custom_call.1} parent=31 // pred_fallthru
          _
        // Predicated region
        $region41: #{tpu_custom_call.1} parent=31 // pred_check
          %p189 = pneg %p84
        $region42: #{tpu_custom_call.1} parent=31 // pred_check_branch
          %191 = sbr.rel (%p189) target = $region44
        $region43: #{tpu_custom_call.1} parent=31 // pred_region
          %192 = dma.done [#allocation6], 128
        $region44: #{tpu_custom_call.1} parent=31 // pred_fallthru
          _
        %s193 = sand.u32 %s29, 1
        %s194 = scalar_lea.sflag [#allocation3], %s193
        %s195 = sand.u32 %s29, 1
        %s196 = smul.addr %s195, 8
        %s197 = scalar_lea.vmem [#allocation2], %s196
        %p198 = pneg %p42
        %p199 = pneg %p39
        %p200 = pneg %p63
        %p201 = pneg %p60
        %p202 = pneg %p84
        %p203 = pneg %p81
        %p204 = pneg %p110
        %p205 = pneg %p107
        %s206 = sand.u32 %s97, 1
        %s207 = scalar_lea.sflag [#allocation4], %s206
        %s208 = sand.u32 %s97, 1
        %s209 = smul.addr %s208, 8
        %s210 = scalar_lea.vmem [#allocation8], %s209
        %v211 = vld [vmem:[%s180] sm:$0xff]
        %212 = vadd.xlane.f32.xlu0 %v211
        %v213 = vpop.xlane.xlu0 %212
        %v214 = vrot.slane %v213, 4
        %v215 = vadd.f32 %v213, %v214
        %v216 = vrot.slane %v215, 2
        %v217 = vadd.f32 %v215, %v216
        %v218 = vrot.slane %v217, 1
        %v219 = vadd.f32 %v217, %v218
        %s220 = vtos %v219
        %v221 = vmul.f32 %v211, %v211
        %222 = vadd.xlane.f32.xlu0 %v221
        %v223 = vpop.xlane.xlu0 %222
        %v224 = vrot.slane %v223, 4
        %v225 = vadd.f32 %v223, %v224
        %v226 = vrot.slane %v225, 2
        %v227 = vadd.f32 %v225, %v226
        %v228 = vrot.slane %v227, 1
        %v229 = vadd.f32 %v227, %v228
        %s230 = vtos %v229
        %v231 = vrcp.pop 1024.0
        %s232 = vtos %v231
        %s233 = smul.f32 %s220, %s232
        %s234 = smul.f32 %s220, %s233
        %s235 = ssub.f32 %s230, %s234
        %v236 = vrcp.pop 1023.0
        %s237 = vtos %v236
        %s238 = smul.f32 %s235, %s237
        %s239 = smax.f32 %s238, 0.0
        %v240 = vstv %s239
        %v241 = vrsqrt.pop %v240
        %v242 = vmul.f32 %v240, %v241
        %vm243 = vcmp.eq.f32.partialorder %v240, inf
        %v244 = vsel %vm243, %v240, %v242
        %vm245 = vcmp.eq.f32.partialorder %v240, 0.0
        %v246 = vand.u32 %v240, 2147483648
        %v247 = vsel %vm245, %v246, %v244
        %s248 = vtos %v247
        %s249 = sadd.f32 %s248, 1e-08
        %v250 = vstv %s249
        %v251 = vrcp.pop %v250
        %s252 = vtos %v251
        %v253 = vld [vmem:[#allocation5] sm:$0xff]
        %v254 = vstv %s252
        %v255 = vmul.f32 %v253, %v254
        %v256 = vstv %s233
        %v257 = vsub.f32 %v211, %v256
        %v258 = vmul.f32 %v257, %v255
        %v259 = vld [vmem:[#allocation7] sm:$0xff]
        %v260 = vadd.f32 %v258, %v259
        %261 = vst [vmem:[%s210] sm:$0xff] %v260
        %s262 = sand.u32 %s97, 1
        %s263 = scalar_lea.sflag [#allocation4], %s262
        %s264 = sand.u32 %s97, 1
        %s265 = smul.addr %s264, 8
        %s266 = scalar_lea.vmem [#allocation8], %s265
        // Predicated region
        $region45: #{tpu_custom_call.1} parent=31 // pred_check
          %p267 = pneg %p107
        $region46: #{tpu_custom_call.1} parent=31 // pred_check_branch
          %269 = sbr.rel (%p267) target = $region48
        $region47: #{tpu_custom_call.1} parent=31 // pred_region
          %s271 = ssub.s32 128, 128
          %272 = vsyncadd %s263, %s271
          %s273 = smul.addr %s21, 128
          %s274 = scalar_lea.hbm %s3, %s273
          %s276 = sshll.u32 %s266, 4
          %s277 = int_to_ptr.vmem [resolvable:$true] %s276
          %279 = dma.vmem_to_hbm [thread:$0]  %s277, 128, %s274, %s263
        $region48: #{tpu_custom_call.1} parent=31 // pred_fallthru
          _
      $region32: #{tpu_custom_call.1} parent=5 // pred_fallthru
        _
      %p280 = scmp.le.s32.totalorder 2, %s16
      // Predicated region
      $region49: #{tpu_custom_call.1} parent=5 // pred_check
        %p281 = pneg %p280
      $region50: #{tpu_custom_call.1} parent=5 // pred_check_branch
        %283 = sbr.rel (%p281) target = $region52
      $region51: #{tpu_custom_call.1} parent=5 // pred_region
        %s284 = ssub.s32 %s16, 2
        // Predicated region
        $region53: #{tpu_custom_call.1} parent=51 // pred_check
          %p285 = pneg %p113
        $region54: #{tpu_custom_call.1} parent=51 // pred_check_branch
          %287 = sbr.rel (%p285) target = $region56
        $region55: #{tpu_custom_call.1} parent=51 // pred_region
          %s288 = sand.u32 %s98, 1
          %s289 = scalar_lea.sflag [#allocation4], %s288
          %s290 = sand.u32 %s98, 1
          %s291 = smul.addr %s290, 8
          %s292 = scalar_lea.vmem [#allocation8], %s291
          %293 = dma.done %s289, 128
        $region56: #{tpu_custom_call.1} parent=51 // pred_fallthru
          _
      $region52: #{tpu_custom_call.1} parent=5 // pred_fallthru
        _
    $region6: #{tpu_custom_call.1} parent=1 // loop_footer
      %s20 = sadd.s32 1, %s16
    $region7: #{tpu_custom_call.1} parent=1 // loop_footer_branch
      %15 = sbr.rel target = $region3
    $region8: #{tpu_custom_call.1} parent=1 // loop_exit
      _
    %294 = vsyncpa [#allocation3], 1
    %s295 = scalar_lea.sflag [#allocation3], 1
    %296 = vsyncpa %s295, 1
    %297 = vsyncpa [#allocation6], 1
    %298 = vsyncpa [#allocation4], 1
    %s299 = scalar_lea.sflag [#allocation4], 1
    %300 = vsyncpa %s299, 1

</llo_original>
